<compile_context>
chip_gen: v7x
topology: tpu7x:2x2x1
jax: 0.10.0
libtpu: 0.0.40
codegen_flags: <defaults>
</compile_context>

<pallas_src>
import math

import jax
import jax.numpy as jnp
from jax.experimental import pallas as pl
from jax.experimental.pallas import tpu as pltpu


def _make_sub_attention_kernel(b_blk, C):
    """Builds the kernel body for a given batch-block size and channel count."""

    def kernel(x_ref, w_ref, bv_ref, t_ref, o_ref):
        # x_ref : (b_blk, Cin, N)  flattened input block
        # w_ref : (3C, Cin)        fused [k; q; v] 1x1-conv weights
        # bv_ref: (C, 1)           v-conv bias
        # t_ref : (1, 1) SMEM      temperature (scalar)
        # o_ref : (b_blk, 1, C, N) output block (b, head, c, hw)
        w = w_ref[...]                 # (3C, Cin)
        bv = bv_ref[...]               # (C, 1)
        t = t_ref[0, 0]                # scalar from SMEM
        eps2 = 1e-24                   # F.normalize eps=1e-12, squared

        # Diagonal-extraction mask for the (2C, 2C) Gram matrix; hoisted out of
        # the batch loop (JAX does not CSE broadcast_in_dim).
        rows = jax.lax.broadcasted_iota(jnp.int32, (2 * C, 2 * C), 0)
        cols = jax.lax.broadcasted_iota(jnp.int32, (2 * C, 2 * C), 1)
        eye = rows == cols

        for bi in range(b_blk):        # static unroll; b_blk is small (<= 8)
            x = x_ref[bi]              # (Cin, N)

            # Fused 1x1 convs: one MXU push -> (3C, N), channels-first / lane-dense.
            y = jnp.dot(w, x, preferred_element_type=jnp.float32)
            y_qk = y[:2 * C]                       # (2C, N): rows 0:C = k, C:2C = q
            v = y[2 * C:] + bv                     # (C, N)

            # Gram matrix over the spatial dim: off-diagonal block = q@k^T,
            # diagonal = squared L2 norms.  One more MXU op instead of VPU/XLU
            # passes over the (C, N) tiles.
            G = jax.lax.dot_general(y_qk, y_qk, (((1,), (1,)), ((), ())),
                                    preferred_element_type=jnp.float32)  # (2C, 2C)

            diag = jnp.where(eye, G, 0.0)
            d_col = jnp.sum(diag, axis=-1, keepdims=True)   # (2C, 1): ||row i||^2
            d_row = jnp.sum(diag, axis=0, keepdims=True)    # (1, 2C): same values
            inv_q = jax.lax.rsqrt(jnp.maximum(d_col[C:], eps2))      # (C, 1)
            inv_k = jax.lax.rsqrt(jnp.maximum(d_row[:, :C], eps2))   # (1, C)

            # attn logits = (q_i . k_j) / (max(||q_i||,eps) * max(||k_j||,eps)) * t
            attn = G[C:, :C] * (inv_q * inv_k) * t           # (C, C)

            # Stable softmax over the last dim (C is small).
            m = jnp.max(attn, axis=-1, keepdims=True)
            e = jnp.exp(attn - m)
            attn = e / jnp.sum(e, axis=-1, keepdims=True)

            # out = attn @ v -> (C, N), lane-dense unmasked store.
            out = jnp.dot(attn, v, preferred_element_type=jnp.float32)
            o_ref[bi, 0] = out.astype(o_ref.dtype)

    return kernel


def _pick_batch_block(B):
    """Largest divisor of B up to 8 that still leaves >= 2 grid steps (v7x megacore)."""
    upper = min(8, max(1, B // 2))
    for cand in range(upper, 0, -1):
        if B % cand == 0:
            return cand
    return 1


def sub_attention_pallas(x, w_qk, w_v, b_v, temperature, *, out_channels, ratio=1):
    """SubAttention forward.  x: (B, Cin, H, W) NCHW, weights in OIHW (1x1)."""
    # TODO(synk): ratio > 1 (strided qk conv with kernel_size=ratio) not implemented.
    assert ratio == 1, "only ratio=1 (module default) is supported"
    B, Cin, H, W = x.shape
    C = out_channels
    N = H * W

    # Free contiguous reshapes + one tiny (3C, Cin) weight concat; no transposes.
    x_flat = x.reshape(B, Cin, N)
    w_fused = jnp.concatenate(
        [w_qk.reshape(2 * C, Cin), w_v.reshape(C, Cin)], axis=0)   # (3C, Cin)
    b_v2 = b_v.reshape(C, 1)
    t2 = temperature.reshape(1, 1).astype(jnp.float32)

    b_blk = _pick_batch_block(B)
    grid = (B // b_blk,)
    kernel = _make_sub_attention_kernel(b_blk, C)

    out = pl.pallas_call(
        kernel,
        out_shape=jax.ShapeDtypeStruct((B, 1, C, N), x.dtype),
        grid_spec=pltpu.PrefetchScalarGridSpec(
            num_scalar_prefetch=0,
            grid=grid,
            in_specs=[
                pl.BlockSpec((b_blk, Cin, N), lambda i: (i, 0, 0)),
                pl.BlockSpec((3 * C, Cin), lambda i: (0, 0)),
                pl.BlockSpec((C, 1), lambda i: (0, 0)),
                pl.BlockSpec(memory_space=pltpu.MemorySpace.SMEM),
            ],
            out_specs=pl.BlockSpec((b_blk, 1, C, N), lambda i: (i, 0, 0, 0)),
        ),
        compiler_params=pltpu.CompilerParams(
            dimension_semantics=("parallel",)),
    )(x_flat, w_fused, b_v2, t2)
    return out  # (B, 1, C, N) — same layout the PyTorch module returns


def _reference_sub_attention(x, w_qk, w_v, b_v, temperature, *, out_channels):
    """Pure-JAX replica of the PyTorch forward (ratio=1)."""
    B, Cin, H, W = x.shape
    C = out_channels
    qk = jax.lax.conv_general_dilated(
        x, w_qk, window_strides=(1, 1), padding="VALID",
        dimension_numbers=("NCHW", "OIHW", "NCHW"))
    v = jax.lax.conv_general_dilated(
        x, w_v, window_strides=(1, 1), padding="VALID",
        dimension_numbers=("NCHW", "OIHW", "NCHW")) + b_v[None, :, None, None]

    q = qk[:, C:].reshape(B, 1, C, H * W)
    k = qk[:, :C].reshape(B, 1, C, H * W)
    v = v.reshape(B, 1, C, H * W)

    def l2n(a):
        n = jnp.sqrt(jnp.sum(a * a, axis=-1, keepdims=True))
        return a / jnp.maximum(n, 1e-12)

    q = l2n(q)
    k = l2n(k)
    attn = jnp.einsum("bhcn,bhdn->bhcd", q, k) * temperature.reshape(())
    attn = jax.nn.softmax(attn, axis=-1)
    return jnp.einsum("bhcd,bhdn->bhcn", attn, v)


if __name__ == "__main__":
    B, Cin, C, H, W = 2, 32, 16, 16, 16

    key = jax.random.PRNGKey(0)
    kx, kqk, kv, kb = jax.random.split(key, 4)

    x = jax.random.normal(kx, (B, Cin, H, W), dtype=jnp.float32)

    # Deterministic param init matching nn.Conv2d's uniform(-1/sqrt(fan_in), ...)
    fan_in = Cin * 1 * 1
    bound = 1.0 / math.sqrt(fan_in)
    w_qk = jax.random.uniform(kqk, (2 * C, Cin, 1, 1), jnp.float32,
                              minval=-bound, maxval=bound)   # qk conv, bias=False
    w_v = jax.random.uniform(kv, (C, Cin, 1, 1), jnp.float32,
                             minval=-bound, maxval=bound)    # v conv
    b_v = jax.random.uniform(kb, (C,), jnp.float32,
                             minval=-bound, maxval=bound)
    temperature = jnp.ones((1, 1, 1), jnp.float32)           # nn.Parameter(torch.ones(1,1,1))

    out = sub_attention_pallas(x, w_qk, w_v, b_v, temperature,
                               out_channels=C, ratio=1)
    out = jax.block_until_ready(out)

    ref = _reference_sub_attention(x, w_qk, w_v, b_v, temperature, out_channels=C)
    assert out.shape == (B, 1, C, H * W)
    assert jnp.allclose(out, ref, atol=1e-4, rtol=1e-4)

    print("KERNEL_OK")
</pallas_src>

<mosaic_0001>
module attributes {stable_mosaic.version = 11 : i64} {
  func.func @kernel(%arg0: i32, %arg1: memref<1x32x256xf32, #tpu.memory_space<vmem>>, %arg2: memref<48x32xf32, #tpu.memory_space<vmem>>, %arg3: memref<16x1xf32, #tpu.memory_space<vmem>>, %arg4: memref<1x1xf32, #tpu.memory_space<smem>>, %arg5: memref<1x1x16x256xf32, #tpu.memory_space<vmem>>) attributes {dimension_semantics = [#tpu.dimension_semantics<parallel>], iteration_bounds = array<i64: 2>, scalar_prefetch = 0 : i64, scratch_operands = 0 : i64, tpu.core_type = #tpu.core_type<tc>, window_params = [{transform_indices = @transform_0, window_bounds = array<i64: 1, 32, 256>}, {pipeline_mode = #tpu.pipeline_mode<synchronous>, transform_indices = @transform_1, window_bounds = array<i64: 48, 32>}, {pipeline_mode = #tpu.pipeline_mode<synchronous>, transform_indices = @transform_2, window_bounds = array<i64: 16, 1>}, {transform_indices = @transform_3, window_bounds = array<i64: 1, 1>}, {transform_indices = @transform_4, window_bounds = array<i64: 1, 1, 16, 256>}]} {
    %c0 = arith.constant 0 : index
    %c0_0 = arith.constant 0 : index
    %0 = vector.load %arg2[%c0, %c0_0] : memref<48x32xf32, #tpu.memory_space<vmem>>, vector<48x32xf32>
    %c0_1 = arith.constant 0 : index
    %c0_2 = arith.constant 0 : index
    %1 = vector.load %arg3[%c0_1, %c0_2] : memref<16x1xf32, #tpu.memory_space<vmem>>, vector<16x1xf32>
    %c0_3 = arith.constant 0 : index
    %c0_4 = arith.constant 0 : index
    %2 = memref.load %arg4[%c0_3, %c0_4] : memref<1x1xf32, #tpu.memory_space<smem>>
    %3 = tpu.iota {dimensions = array<i32: 0>} : vector<32x32xi32>
    %4 = tpu.iota {dimensions = array<i32: 1>} : vector<32x32xi32>
    %5 = arith.cmpi eq, %3, %4 : vector<32x32xi32>
    %c0_5 = arith.constant 0 : index
    %c0_6 = arith.constant 0 : index
    %c0_7 = arith.constant 0 : index
    %6 = vector.load %arg1[%c0_5, %c0_6, %c0_7] : memref<1x32x256xf32, #tpu.memory_space<vmem>>, vector<1x32x256xf32>
    %7 = vector.shape_cast %6 : vector<1x32x256xf32> to vector<32x256xf32>
    %cst = arith.constant dense<0.000000e+00> : vector<48x256xf32>
    %8 = tpu.matmul %0, %7, %cst {dimension_numbers = #tpu.dot_dimension_numbers<[1], [0], [0], [1], [0, 0, 1, 1], [], []>} : vector<48x32xf32>, vector<32x256xf32>, vector<48x256xf32> -> vector<48x256xf32>
    %9 = vector.extract_strided_slice %8 {offsets = [0, 0], sizes = [32, 256], strides = [1, 1]} : vector<48x256xf32> to vector<32x256xf32>
    %10 = vector.extract_strided_slice %8 {offsets = [32, 0], sizes = [16, 256], strides = [1, 1]} : vector<48x256xf32> to vector<16x256xf32>
    %11 = vector.broadcast %1 : vector<16x1xf32> to vector<16x256xf32>
    %12 = arith.addf %10, %11 : vector<16x256xf32>
    %cst_8 = arith.constant dense<0.000000e+00> : vector<32x32xf32>
    %13 = tpu.matmul %9, %9, %cst_8 {dimension_numbers = #tpu.dot_dimension_numbers<[1], [1], [0], [0], [0, 0, 1, 0], [], []>} : vector<32x256xf32>, vector<32x256xf32>, vector<32x32xf32> -> vector<32x32xf32>
    %cst_9 = arith.constant 0.000000e+00 : f32
    %14 = vector.broadcast %cst_9 : f32 to vector<32x32xf32>
    %15 = arith.select %5, %13, %14 : vector<32x32xi1>, vector<32x32xf32>
    %cst_10 = arith.constant dense<0.000000e+00> : vector<32xf32>
    %16 = vector.multi_reduction <add>, %15, %cst_10 [1] : vector<32x32xf32> to vector<32xf32>
    %17 = vector.shape_cast %16 : vector<32xf32> to vector<32x1xf32>
    %cst_11 = arith.constant dense<0.000000e+00> : vector<32xf32>
    %18 = vector.multi_reduction <add>, %15, %cst_11 [0] : vector<32x32xf32> to vector<32xf32>
    %19 = vector.shape_cast %18 : vector<32xf32> to vector<1x32xf32>
    %20 = vector.extract_strided_slice %17 {offsets = [16, 0], sizes = [16, 1], strides = [1, 1]} : vector<32x1xf32> to vector<16x1xf32>
    %cst_12 = arith.constant 1.000000e-24 : f32
    %21 = vector.broadcast %cst_12 : f32 to vector<16x1xf32>
    %22 = arith.maximumf %20, %21 : vector<16x1xf32>
    %23 = math.rsqrt %22 : vector<16x1xf32>
    %24 = vector.extract_strided_slice %19 {offsets = [0, 0], sizes = [1, 16], strides = [1, 1]} : vector<1x32xf32> to vector<1x16xf32>
    %cst_13 = arith.constant 1.000000e-24 : f32
    %25 = vector.broadcast %cst_13 : f32 to vector<1x16xf32>
    %26 = arith.maximumf %24, %25 : vector<1x16xf32>
    %27 = math.rsqrt %26 : vector<1x16xf32>
    %28 = vector.extract_strided_slice %13 {offsets = [16, 0], sizes = [16, 16], strides = [1, 1]} : vector<32x32xf32> to vector<16x16xf32>
    %29 = vector.broadcast %23 : vector<16x1xf32> to vector<16x16xf32>
    %30 = vector.broadcast %27 : vector<1x16xf32> to vector<16x16xf32>
    %31 = arith.mulf %29, %30 : vector<16x16xf32>
    %32 = arith.mulf %28, %31 : vector<16x16xf32>
    %33 = vector.broadcast %2 : f32 to vector<16x16xf32>
    %34 = arith.mulf %32, %33 : vector<16x16xf32>
    %cst_14 = arith.constant dense<0xFF800000> : vector<16xf32>
    %35 = vector.multi_reduction <maximumf>, %34, %cst_14 [1] : vector<16x16xf32> to vector<16xf32>
    %36 = vector.shape_cast %35 : vector<16xf32> to vector<16x1xf32>
    %37 = vector.broadcast %36 : vector<16x1xf32> to vector<16x16xf32>
    %38 = arith.subf %34, %37 : vector<16x16xf32>
    %39 = math.exp %38 : vector<16x16xf32>
    %cst_15 = arith.constant dense<0.000000e+00> : vector<16xf32>
    %40 = vector.multi_reduction <add>, %39, %cst_15 [1] : vector<16x16xf32> to vector<16xf32>
    %41 = vector.shape_cast %40 : vector<16xf32> to vector<16x1xf32>
    %42 = vector.broadcast %41 : vector<16x1xf32> to vector<16x16xf32>
    %43 = arith.divf %39, %42 : vector<16x16xf32>
    %cst_16 = arith.constant dense<0.000000e+00> : vector<16x256xf32>
    %44 = tpu.matmul %43, %12, %cst_16 {dimension_numbers = #tpu.dot_dimension_numbers<[1], [0], [0], [1], [0, 0, 1, 1], [], []>} : vector<16x16xf32>, vector<16x256xf32>, vector<16x256xf32> -> vector<16x256xf32>
    %c0_17 = arith.constant 0 : index
    %c0_18 = arith.constant 0 : index
    %c0_19 = arith.constant 0 : index
    %c0_20 = arith.constant 0 : index
    %45 = vector.load %arg5[%c0_17, %c0_18, %c0_19, %c0_20] : memref<1x1x16x256xf32, #tpu.memory_space<vmem>>, vector<1x1x16x256xf32>
    %46 = vector.shape_cast %45 : vector<1x1x16x256xf32> to vector<16x256xf32>
    %47 = vector.shape_cast %44 : vector<16x256xf32> to vector<1x1x16x256xf32>
    tpu.vector_store %arg5[%c0_17, %c0_18, %c0_19, %c0_20], %47 {strides = array<i32>} : memref<1x1x16x256xf32, #tpu.memory_space<vmem>>, vector<1x1x16x256xf32>,
    return
  }
  func.func @transform_0(%arg0: i32) -> (i32, i32, i32) {
    %c0_i32 = arith.constant 0 : i32
    %c0_i32_0 = arith.constant 0 : i32
    %c0_i32_1 = arith.constant 0 : i32
    return %arg0, %c0_i32, %c0_i32_0 : i32, i32, i32
  }
  func.func @transform_1(%arg0: i32) -> (i32, i32) {
    %c0_i32 = arith.constant 0 : i32
    %c0_i32_0 = arith.constant 0 : i32
    %c0_i32_1 = arith.constant 0 : i32
    return %c0_i32, %c0_i32_0 : i32, i32
  }
  func.func @transform_2(%arg0: i32) -> (i32, i32) {
    %c0_i32 = arith.constant 0 : i32
    %c0_i32_0 = arith.constant 0 : i32
    %c0_i32_1 = arith.constant 0 : i32
    return %c0_i32, %c0_i32_0 : i32, i32
  }
  func.func @transform_3(%arg0: i32) -> (i32, i32) {
    %c0_i32 = arith.constant 0 : i32
    %c0_i32_0 = arith.constant 0 : i32
    %c0_i32_1 = arith.constant 0 : i32
    return %c0_i32, %c0_i32_0 : i32, i32
  }
  func.func @transform_4(%arg0: i32) -> (i32, i32, i32, i32) {
    %c0_i32 = arith.constant 0 : i32
    %c0_i32_0 = arith.constant 0 : i32
    %c0_i32_1 = arith.constant 0 : i32
    %c0_i32_2 = arith.constant 0 : i32
    return %arg0, %c0_i32, %c0_i32_0, %c0_i32_1 : i32, i32, i32, i32
  }
}

</mosaic_0001>

<llo_original>
// kernel: tpu_custom_call.1
$region0: #{tpu_custom_call.1}
  #allocation0 [shape = 'u32[]', space=smem, size = 0x4, offset = 0x4, fixed_abs, tag = 'smem constant byte address 0x4 - core index']
  #allocation1 [shape = 'u32[144,128]{1,0:T(1,128)}', space=vmem, size = 0x12000, scoped, tag = 'internal scratch']
  #allocation2 [shape = 'f32[1,1]{1,0:T(1,128)S(6)}', space=smem, size = 0x200, scoped, tag = 'scoped memory for tpu_custom_call.1']
  %s0 = inlined_call_operand.hbm [shape: f32[2,32,256], index: 0, kind: input, shape index: {}]
  %s1 = inlined_call_operand.vmem [shape: f32[48,32], index: 1, kind: input, shape index: {}]
  %s2 = inlined_call_operand.vmem [shape: f32[16,1], index: 2, kind: input, shape index: {}]
  %s3 = inlined_call_operand.<no memory space> [shape: f32[1,1], index: 3, kind: input, shape index: {}]
  %s4 = inlined_call_operand.hbm [shape: f32[2,1,16,256], index: 4, kind: output, shape index: {}]
  %s5 = sld [smem:[#allocation0]]
  $region53: #{tpu_custom_call.1} parent=0
    _
  %s7 = ssub.s32 1, %s5
  %s8 = scalar_select 0, %s7, %s5
  %9 = sst [smem:[#allocation2]] %s3
  $region1: #{tpu_custom_call.1} parent=0
    #allocation3 [shape = 'u8[65536]{0}', space=vmem, size = 0x10000, scoped, tag = 'input window, operand 0']
    #allocation4 [shape = 's32[2]{0}', space=sflag, size = 0x8, scoped, tag = 'scoped memory for tpu_custom_call.1']
    #allocation5 [shape = 's32[2]{0}', space=sflag, size = 0x8, scoped, tag = 'scoped memory for tpu_custom_call.1']
    #allocation6 [shape = 'u8[32768]{0}', space=vmem, size = 0x8000, scoped, tag = 'output window, operand 0']
    %10 = vsyncpa [#allocation4], 0
    %s11 = scalar_lea.sflag [#allocation4], 1
    %12 = vsyncpa %s11, 0
    %13 = vsyncpa [#allocation5], 0
    %s14 = scalar_lea.sflag [#allocation5], 1
    %15 = vsyncpa %s14, 0
    loop: start=0, step=1, limit=4
    $region2: #{tpu_custom_call.1} parent=1 // loop_pre_header
      _
    $region3: #{tpu_custom_call.1} parent=1 // loop_header
      %s17 = sphi 0, %s21
      %p18 = scmp.ge.s32.totalorder %s17, 4
      %s27 = sphi 0, %s29
      %s30 = sphi 0, %s27
      %s31 = sphi 0, %s30
      %s47 = sphi 0, %s31
      %s51 = sphi 0, %s51
      %s53 = sphi 0, %s51
      %s54 = sphi 0, %s53
      %s68 = sphi 0, %s54
      %s72 = sphi 0, %s72
      %s74 = sphi 0, %s72
      %s75 = sphi 0, %s74
      %s89 = sphi 0, %s75
      %s93 = sphi 0, %s93
      %s95 = sphi 0, %s93
      %s96 = sphi 0, %s95
      %s110 = sphi 0, %s96
      %s116 = sphi 0, %s118
      %s119 = sphi 0, %s116
      %s120 = sphi 0, %s119
      %s136 = sphi 0, %s120
    $region4: #{tpu_custom_call.1} parent=1 // loop_header_branch
      %20 = sbr.rel (%p18) target = $region8
    $region5: #{tpu_custom_call.1} parent=1 // loop_body
      %s22 = ssub.s32 %s17, 1
      %s23 = ssub.s32 %s17, 2
      %s24 = sadd.s32 %s17, 1
      %s25 = ssub.s32 %s17, %s24
      %p26 = scmp.eq.s32.totalorder %s25, 0
      %s28 = sadd.s32 %s27, 1
      %s29 = scalar_select %p26, %s27, %s28
      %p32 = pneg %p26
      %p33 = scmp.eq.s32.totalorder %s17, 1
      %p34 = por %p32, %p33
      %p35 = scmp.ne.s32.totalorder %s27, %s30
      %p36 = scmp.eq.s32.totalorder %s17, 0
      %p37 = por %p35, %p36
      %p38 = scmp.ne.s32.totalorder %s27, %s30
      %p39 = scmp.eq.s32.totalorder %s22, 1
      %p40 = por %p38, %p39
      %p41 = scmp.ne.s32.totalorder %s30, %s31
      %p42 = scmp.eq.s32.totalorder %s22, 0
      %p43 = por %p41, %p42
      %p44 = scmp.ne.s32.totalorder %s30, %s31
      %p45 = scmp.eq.s32.totalorder %s23, 1
      %p46 = por %p44, %p45
      %p48 = scmp.ne.s32.totalorder %s31, %s47
      %p49 = scmp.eq.s32.totalorder %s23, 0
      %p50 = por %p48, %p49
      %s52 = sadd.s32 %s51, 1
      %p55 = scmp.eq.s32.totalorder %s17, 1
      %p56 = scmp.ne.s32.totalorder %s51, %s53
      %p57 = scmp.eq.s32.totalorder %s17, 0
      %p58 = por %p56, %p57
      %p59 = scmp.ne.s32.totalorder %s51, %s53
      %p60 = scmp.eq.s32.totalorder %s22, 1
      %p61 = por %p59, %p60
      %p62 = scmp.ne.s32.totalorder %s53, %s54
      %p63 = scmp.eq.s32.totalorder %s22, 0
      %p64 = por %p62, %p63
      %p65 = scmp.ne.s32.totalorder %s53, %s54
      %p66 = scmp.eq.s32.totalorder %s23, 1
      %p67 = por %p65, %p66
      %p69 = scmp.ne.s32.totalorder %s54, %s68
      %p70 = scmp.eq.s32.totalorder %s23, 0
      %p71 = por %p69, %p70
      %s73 = sadd.s32 %s72, 1
      %p76 = scmp.eq.s32.totalorder %s17, 1
      %p77 = scmp.ne.s32.totalorder %s72, %s74
      %p78 = scmp.eq.s32.totalorder %s17, 0
      %p79 = por %p77, %p78
      %p80 = scmp.ne.s32.totalorder %s72, %s74
      %p81 = scmp.eq.s32.totalorder %s22, 1
      %p82 = por %p80, %p81
      %p83 = scmp.ne.s32.totalorder %s74, %s75
      %p84 = scmp.eq.s32.totalorder %s22, 0
      %p85 = por %p83, %p84
      %p86 = scmp.ne.s32.totalorder %s74, %s75
      %p87 = scmp.eq.s32.totalorder %s23, 1
      %p88 = por %p86, %p87
      %p90 = scmp.ne.s32.totalorder %s75, %s89
      %p91 = scmp.eq.s32.totalorder %s23, 0
      %p92 = por %p90, %p91
      %s94 = sadd.s32 %s93, 1
      %p97 = scmp.eq.s32.totalorder %s17, 1
      %p98 = scmp.ne.s32.totalorder %s93, %s95
      %p99 = scmp.eq.s32.totalorder %s17, 0
      %p100 = por %p98, %p99
      %p101 = scmp.ne.s32.totalorder %s93, %s95
      %p102 = scmp.eq.s32.totalorder %s22, 1
      %p103 = por %p101, %p102
      %p104 = scmp.ne.s32.totalorder %s95, %s96
      %p105 = scmp.eq.s32.totalorder %s22, 0
      %p106 = por %p104, %p105
      %p107 = scmp.ne.s32.totalorder %s95, %s96
      %p108 = scmp.eq.s32.totalorder %s23, 1
      %p109 = por %p107, %p108
      %p111 = scmp.ne.s32.totalorder %s96, %s110
      %p112 = scmp.eq.s32.totalorder %s23, 0
      %p113 = por %p111, %p112
      %s114 = ssub.s32 %s17, %s24
      %p115 = scmp.eq.s32.totalorder %s114, 0
      %s117 = sadd.s32 %s116, 1
      %s118 = scalar_select %p115, %s116, %s117
      %p121 = pneg %p115
      %p122 = scmp.eq.s32.totalorder %s17, 1
      %p123 = por %p121, %p122
      %p124 = scmp.ne.s32.totalorder %s116, %s119
      %p125 = scmp.eq.s32.totalorder %s17, 0
      %p126 = por %p124, %p125
      %p127 = scmp.ne.s32.totalorder %s116, %s119
      %p128 = scmp.eq.s32.totalorder %s22, 1
      %p129 = por %p127, %p128
      %p130 = scmp.ne.s32.totalorder %s119, %s120
      %p131 = scmp.eq.s32.totalorder %s22, 0
      %p132 = por %p130, %p131
      %p133 = scmp.ne.s32.totalorder %s119, %s120
      %p134 = scmp.eq.s32.totalorder %s23, 1
      %p135 = por %p133, %p134
      %p137 = scmp.ne.s32.totalorder %s120, %s136
      %p138 = scmp.eq.s32.totalorder %s23, 0
      %p139 = por %p137, %p138
      %p140 = scmp.le.s32.totalorder 1, %s17
      %p141 = scmp.lt.s32.totalorder %s17, 3
      %p142 = pnand %p140, %p141
      %p143 = pneg %p142
      // Predicated region
      $region9: #{tpu_custom_call.1} parent=5 // pred_check
        _
      $region10: #{tpu_custom_call.1} parent=5 // pred_check_branch
        %145 = sbr.rel (%p142) target = $region12
      $region11: #{tpu_custom_call.1} parent=5 // pred_region
        %s146 = ssub.s32 %s17, 1
        // Predicated region
        $region13: #{tpu_custom_call.1} parent=11 // pred_check
          %p147 = pneg %p64
        $region14: #{tpu_custom_call.1} parent=11 // pred_check_branch
          %149 = sbr.rel (%p147) target = $region16
        $region15: #{tpu_custom_call.1} parent=11 // pred_region
          _
        $region16: #{tpu_custom_call.1} parent=11 // pred_fallthru
          _
        // Predicated region
        $region17: #{tpu_custom_call.1} parent=11 // pred_check
          %p150 = pneg %p85
        $region18: #{tpu_custom_call.1} parent=11 // pred_check_branch
          %152 = sbr.rel (%p150) target = $region20
        $region19: #{tpu_custom_call.1} parent=11 // pred_region
          _
        $region20: #{tpu_custom_call.1} parent=11 // pred_fallthru
          _
        // Predicated region
        $region21: #{tpu_custom_call.1} parent=11 // pred_check
          %p153 = pneg %p106
        $region22: #{tpu_custom_call.1} parent=11 // pred_check_branch
          %155 = sbr.rel (%p153) target = $region24
        $region23: #{tpu_custom_call.1} parent=11 // pred_region
          _
        $region24: #{tpu_custom_call.1} parent=11 // pred_fallthru
          _
      $region12: #{tpu_custom_call.1} parent=5 // pred_fallthru
        _
      %p156 = scmp.lt.s32.totalorder %s17, 2
      // Predicated region
      $region25: #{tpu_custom_call.1} parent=5 // pred_check
        %p157 = pneg %p156
      $region26: #{tpu_custom_call.1} parent=5 // pred_check_branch
        %159 = sbr.rel (%p157) target = $region28
      $region27: #{tpu_custom_call.1} parent=5 // pred_region
        // Predicated region
        $region29: #{tpu_custom_call.1} parent=27 // pred_check
          %p160 = pneg %p37
        $region30: #{tpu_custom_call.1} parent=27 // pred_check_branch
          %162 = sbr.rel (%p160) target = $region32
        $region31: #{tpu_custom_call.1} parent=27 // pred_region
          %s163 = sand.u32 %s27, 1
          %s164 = scalar_lea.sflag [#allocation4], %s163
          %s165 = sand.u32 %s27, 1
          %s166 = smul.addr %s165, 64
          %s167 = scalar_lea.vmem [#allocation3], %s166
          %s169 = ssub.s32 1024, 1024
          %170 = vsyncadd %s164, %s169
          %s171 = smul.addr %s17, 8
          %s172 = smul.addr %s171, 128
          %s173 = scalar_lea.hbm %s0, %s172
          %s174 = sshll.u32 %s167, 4
          %s175 = int_to_ptr.vmem [resolvable:$true] %s174
          %180 = dma.hbm_to_vmem [thread:$0]  %s173, 1024, %s175, %s164, 256, 256, 16
        $region32: #{tpu_custom_call.1} parent=27 // pred_fallthru
          _
      $region28: #{tpu_custom_call.1} parent=5 // pred_fallthru
        _
      %p181 = scmp.le.s32.totalorder 1, %s17
      %p182 = scmp.lt.s32.totalorder %s17, 3
      %p183 = pnand %p181, %p182
      %p184 = pneg %p183
      // Predicated region
      $region33: #{tpu_custom_call.1} parent=5 // pred_check
        _
      $region34: #{tpu_custom_call.1} parent=5 // pred_check_branch
        %186 = sbr.rel (%p183) target = $region36
      $region35: #{tpu_custom_call.1} parent=5 // pred_region
        %s187 = ssub.s32 %s17, 1
        %s188 = sand.u32 %s30, 1
        %s189 = scalar_lea.sflag [#allocation4], %s188
        %s190 = sand.u32 %s30, 1
        %s191 = smul.addr %s190, 64
        %s192 = scalar_lea.vmem [#allocation3], %s191
        // Predicated region
        $region37: #{tpu_custom_call.1} parent=35 // pred_check
          %p193 = pneg %p43
        $region38: #{tpu_custom_call.1} parent=35 // pred_check_branch
          %195 = sbr.rel (%p193) target = $region40
        $region39: #{tpu_custom_call.1} parent=35 // pred_region
          %196 = dma.done %s189, 1024
        $region40: #{tpu_custom_call.1} parent=35 // pred_fallthru
          _
        %s197 = sand.u32 %s30, 1
        %s198 = scalar_lea.sflag [#allocation4], %s197
        %s199 = sand.u32 %s30, 1
        %s200 = smul.addr %s199, 64
        %s201 = scalar_lea.vmem [#allocation3], %s200
        %p202 = pneg %p43
        %p203 = pneg %p40
        %p204 = pneg %p64
        %p205 = pneg %p61
        %p206 = pneg %p85
        %p207 = pneg %p82
        %p208 = pneg %p106
        %p209 = pneg %p103
        %p210 = pneg %p132
        %p211 = pneg %p129
        %s212 = sand.u32 %s119, 1
        %s213 = scalar_lea.sflag [#allocation5], %s212
        %s214 = sand.u32 %s119, 1
        %s215 = smul.addr %s214, 32
        %s216 = scalar_lea.vmem [#allocation6], %s215
        %v217 = vld [vmem:[%s1] sm:$0xff]
        %v218 = vld [vmem:[%s1 + $0x8] sm:$0xff]
        %v219 = vld [vmem:[%s1 + $0x10] sm:$0xff]
        %v220 = vld [vmem:[%s1 + $0x18] sm:$0xff]
        %v221 = vld [vmem:[%s1 + $0x20] sm:$0xff]
        %v222 = vld [vmem:[%s1 + $0x28] sm:$0xff]
        %v223 = vld [vmem:[%s2] sm:$0xff]
        %v224 = vld [vmem:[%s2 + $0x8] sm:$0xff]
        %s225 = sld [smem:[#allocation2]]
        %v226 = vlaneseq
        %v227 = vshrl.u32 %v226, 7
        %v228 = vadd.s32 %v227, 8
        %v229 = vadd.s32 %v227, 16
        %v230 = vadd.s32 %v227, 24
        %v231 = vlaneseq
        %v232 = vand.u32 %v231, 127
        %vm233 = vcmp.eq.s32.totalorder %v227, %v232
        %vm234 = vcmp.eq.s32.totalorder %v228, %v232
        %vm235 = vcmp.eq.s32.totalorder %v229, %v232
        %vm236 = vcmp.eq.s32.totalorder %v230, %v232
        %v237 = vld [vmem:[%s192] sm:$0xff]
        %v238 = vld [vmem:[%s192 + $0x8] sm:$0xff]
        %v239 = vld [vmem:[%s192 + $0x10] sm:$0xff]
        %v240 = vld [vmem:[%s192 + $0x18] sm:$0xff]
        %v241 = vld [vmem:[%s192 + $0x20] sm:$0xff]
        %v242 = vld [vmem:[%s192 + $0x28] sm:$0xff]
        %v243 = vld [vmem:[%s192 + $0x30] sm:$0xff]
        %v244 = vld [vmem:[%s192 + $0x38] sm:$0xff]
        %vm245 = vcmask 261120
        %v247 = vsel %vm245, %v217, 0
        %v250 = vsel %vm245, %v218, 0
        %v253 = vsel %vm245, %v219, 0
        %v256 = vsel %vm245, %v220, 0
        %v259 = vsel %vm245, %v221, 0
        %v262 = vsel %vm245, %v222, 0
        %264 = vmatprep.subr.mxu0 %v238
        %265 = vmatpush1.msra.mxu0 %v237
        %266 = vmatprep.subr.mxu0 %v240
        %267 = vmatpush1.msra.mxu0 %v239
        %268 = vmatprep.subr.mxu0 %v242
        %269 = vmatpush1.msra.mxu0 %v241
        %270 = vmatprep.subr.mxu0 %v244
        %271 = vmatpush1.msra.mxu0 %v243
        %272 = vmatprep.subr.mxu0 0.0
        %273 = vmatpush1.msra.mxu0 0.0
        %274 = vmatprep.subr.mxu0 0.0
        %275 = vmatpush1.msra.mxu0 0.0
        %276 = vmatprep.subr.mxu0 0.0
        %277 = vmatpush1.msra.mxu0 0.0
        %278 = vmatprep.subr.mxu0 0.0
        %279 = vmatpush1.msra.mxu0 0.0
        %280 = vmatprep.subr.mxu0 0.0
        %281 = vmatpush1.msra.mxu0 0.0
        %282 = vmatprep.subr.mxu0 0.0
        %283 = vmatpush1.msra.mxu0 0.0
        %284 = vmatprep.subr.mxu0 0.0
        %285 = vmatpush1.msra.mxu0 0.0
        %286 = vmatprep.subr.mxu0 0.0
        %287 = vmatpush1.msra.mxu0 0.0
        %288 = vmatprep.subr.mxu0 0.0
        %289 = vmatpush1.msra.mxu0 0.0
        %290 = vmatprep.subr.mxu0 0.0
        %291 = vmatpush1.msra.mxu0 0.0
        %292 = vmatprep.subr.mxu0 0.0
        %293 = vmatpush1.msra.mxu0 0.0
        %294 = vmatprep.subr.mxu0 0.0
        %295 = vmatpush1.msra.mxu0 0.0
        %296 = vmatprep.subr.mxu0 0.0
        %297 = vmatpush1.msra.mxu0 0.0
        %298 = vmatprep.subr.mxu0 0.0
        %299 = vmatpush1.msra.mxu0 0.0
        %300 = vmatprep.subr.mxu0 0.0
        %301 = vmatpush1.msra.mxu0 0.0
        %302 = vmatprep.subr.mxu0 0.0
        %303 = vmatpush1.msra.mxu0 0.0
        %304 = vmatprep.subr.mxu0 0.0
        %305 = vmatpush1.msra.mxu0 0.0
        %306 = vmatprep.subr.mxu0 0.0
        %307 = vmatpush1.msra.mxu0 0.0
        %308 = vmatprep.subr.mxu0 0.0
        %309 = vmatpush1.msra.mxu0 0.0
        %310 = vmatprep.subr.mxu0 0.0
        %311 = vmatpush1.msra.mxu0 0.0
        %312 = vmatprep.subr.mxu0 0.0
        %313 = vmatpush1.msra.mxu0 0.0
        %314 = vmatprep.subr.mxu0 0.0
        %315 = vmatpush1.msra.mxu0 0.0
        %316 = vmatprep.subr.mxu0 0.0
        %317 = vmatpush1.msra.mxu0 0.0
        %318 = vmatprep.subr.mxu0 0.0
        %319 = vmatpush1.msra.mxu0 0.0
        %320 = vmatprep.subr.mxu0 0.0
        %321 = vmatpush1.msra.mxu0 0.0
        %322 = vmatprep.subr.mxu0 0.0
        %323 = vmatpush1.msra.mxu0 0.0
        %324 = vmatprep.subr.mxu0 0.0
        %325 = vmatpush1.msra.mxu0 0.0
        %326 = vmatprep.subr.mxu0 0.0
        %327 = vmatpush1.msra.mxu0 0.0
        %328 = vmatprep.mubr.f32.mxu0 0.0
        %329 = vmatmul.mubr.f32.gmra.mrb[0].mxu0 %v247
        %v330 = vpop.f32.mrb[0].mxu0
        %v331 = vadd.f32 0.0, %v330
        %v332 = vpop.f32.mrb[0].mxu0
        %v333 = vadd.f32 0.0, %v332
        %334 = vmatprep.mubr.f32.mxu0 0.0
        %335 = vmatmul.mubr.f32.gmra.mrb[0].mxu0 %v250
        %v336 = vpop.f32.mrb[0].mxu0
        %v337 = vadd.f32 0.0, %v336
        %v338 = vpop.f32.mrb[0].mxu0
        %v339 = vadd.f32 0.0, %v338
        %340 = vmatprep.mubr.f32.mxu0 0.0
        %341 = vmatmul.mubr.f32.gmra.mrb[0].mxu0 %v253
        %v342 = vpop.f32.mrb[0].mxu0
        %v343 = vadd.f32 0.0, %v342
        %v344 = vpop.f32.mrb[0].mxu0
        %v345 = vadd.f32 0.0, %v344
        %346 = vmatprep.mubr.f32.mxu0 0.0
        %347 = vmatmul.mubr.f32.gmra.mrb[0].mxu0 %v256
        %v348 = vpop.f32.mrb[0].mxu0
        %v349 = vadd.f32 0.0, %v348
        %v350 = vpop.f32.mrb[0].mxu0
        %v351 = vadd.f32 0.0, %v350
        %352 = vmatprep.mubr.f32.mxu0 0.0
        %353 = vmatmul.mubr.f32.gmra.mrb[0].mxu0 %v259
        %v354 = vpop.f32.mrb[0].mxu0
        %v355 = vadd.f32 0.0, %v354
        %v356 = vpop.f32.mrb[0].mxu0
        %v357 = vadd.f32 0.0, %v356
        %358 = vmatprep.mubr.f32.mxu0 0.0
        %359 = vmatmul.mubr.f32.gmra.mrb[0].mxu0 %v262
        %v360 = vpop.f32.mrb[0].mxu0
        %v361 = vadd.f32 0.0, %v360
        %v362 = vpop.f32.mrb[0].mxu0
        %v363 = vadd.f32 0.0, %v362
        %364 = vdwg.mxu0
        %366 = vset.pattern.permute.xlu0 0
        %367 = vperm.xlu0 %366, %v223
        %v368 = vpop.permute.xlu0 %367
        %371 = vset.pattern.permute.xlu0 0
        %372 = vperm.xlu0 %371, %v224
        %v373 = vpop.permute.xlu0 %372
        %v375 = vadd.f32 %v355, %v368
        %v376 = vadd.f32 %v357, %v368
        %v377 = vadd.f32 %v361, %v373
        %v378 = vadd.f32 %v363, %v373
        %379 = vmatprep.subr.mxu0 %v333
        %380 = vmatpush1.xpose.msra.mxu0 %v331
        %381 = vmatprep.subr.mxu0 %v339
        %382 = vmatpush1.xpose.msra.mxu0 %v337
        %383 = vmatprep.subr.mxu0 %v345
        %384 = vmatpush1.xpose.msra.mxu0 %v343
        %385 = vmatprep.subr.mxu0 %v351
        %386 = vmatpush1.xpose.msra.mxu0 %v349
        %387 = vmatprep.subr.mxu0 0.0
        %388 = vmatpush1.xpose.msra.mxu0 0.0
        %389 = vmatprep.subr.mxu0 0.0
        %390 = vmatpush1.xpose.msra.mxu0 0.0
        %391 = vmatprep.subr.mxu0 0.0
        %392 = vmatpush1.xpose.msra.mxu0 0.0
        %393 = vmatprep.subr.mxu0 0.0
        %394 = vmatpush1.xpose.msra.mxu0 0.0
        %395 = vmatprep.subr.mxu0 0.0
        %396 = vmatpush1.xpose.msra.mxu0 0.0
        %397 = vmatprep.subr.mxu0 0.0
        %398 = vmatpush1.xpose.msra.mxu0 0.0
        %399 = vmatprep.subr.mxu0 0.0
        %400 = vmatpush1.xpose.msra.mxu0 0.0
        %401 = vmatprep.subr.mxu0 0.0
        %402 = vmatpush1.xpose.msra.mxu0 0.0
        %403 = vmatprep.subr.mxu0 0.0
        %404 = vmatpush1.xpose.msra.mxu0 0.0
        %405 = vmatprep.subr.mxu0 0.0
        %406 = vmatpush1.xpose.msra.mxu0 0.0
        %407 = vmatprep.subr.mxu0 0.0
        %408 = vmatpush1.xpose.msra.mxu0 0.0
        %409 = vmatprep.subr.mxu0 0.0
        %410 = vmatpush1.xpose.msra.mxu0 0.0
        %411 = vmatprep.subr.mxu0 0.0
        %412 = vmatpush1.xpose.msra.mxu0 0.0
        %413 = vmatprep.subr.mxu0 0.0
        %414 = vmatpush1.xpose.msra.mxu0 0.0
        %415 = vmatprep.subr.mxu0 0.0
        %416 = vmatpush1.xpose.msra.mxu0 0.0
        %417 = vmatprep.subr.mxu0 0.0
        %418 = vmatpush1.xpose.msra.mxu0 0.0
        %419 = vmatprep.subr.mxu0 0.0
        %420 = vmatpush1.xpose.msra.mxu0 0.0
        %421 = vmatprep.subr.mxu0 0.0
        %422 = vmatpush1.xpose.msra.mxu0 0.0
        %423 = vmatprep.subr.mxu0 0.0
        %424 = vmatpush1.xpose.msra.mxu0 0.0
        %425 = vmatprep.subr.mxu0 0.0
        %426 = vmatpush1.xpose.msra.mxu0 0.0
        %427 = vmatprep.subr.mxu0 0.0
        %428 = vmatpush1.xpose.msra.mxu0 0.0
        %429 = vmatprep.subr.mxu0 0.0
        %430 = vmatpush1.xpose.msra.mxu0 0.0
        %431 = vmatprep.subr.mxu0 0.0
        %432 = vmatpush1.xpose.msra.mxu0 0.0
        %433 = vmatprep.subr.mxu0 0.0
        %434 = vmatpush1.xpose.msra.mxu0 0.0
        %435 = vmatprep.subr.mxu0 0.0
        %436 = vmatpush1.xpose.msra.mxu0 0.0
        %437 = vmatprep.subr.mxu0 0.0
        %438 = vmatpush1.xpose.msra.mxu0 0.0
        %439 = vmatprep.subr.mxu0 0.0
        %440 = vmatpush1.xpose.msra.mxu0 0.0
        %441 = vmatprep.subr.mxu0 0.0
        %442 = vmatpush1.xpose.msra.mxu0 0.0
        %443 = vmatprep.mubr.f32.mxu0 %v333
        %444 = vmatmul.mubr.f32.gmra.mrb[0].mxu0 %v331
        %v445 = vpop.f32.mrb[0].mxu0
        %v446 = vadd.f32 0.0, %v445
        %v447 = vpop.f32.mrb[0].mxu0
        %448 = vmatprep.mubr.f32.mxu0 %v339
        %449 = vmatmul.mubr.f32.gmra.mrb[0].mxu0 %v337
        %v450 = vpop.f32.mrb[0].mxu0
        %v451 = vadd.f32 0.0, %v450
        %v452 = vpop.f32.mrb[0].mxu0
        %453 = vmatprep.mubr.f32.mxu0 %v345
        %454 = vmatmul.mubr.f32.gmra.mrb[0].mxu0 %v343
        %v455 = vpop.f32.mrb[0].mxu0
        %v456 = vadd.f32 0.0, %v455
        %v457 = vpop.f32.mrb[0].mxu0
        %458 = vmatprep.mubr.f32.mxu0 %v351
        %459 = vmatmul.mubr.f32.gmra.mrb[0].mxu0 %v349
        %v460 = vpop.f32.mrb[0].mxu0
        %v461 = vadd.f32 0.0, %v460
        %v462 = vpop.f32.mrb[0].mxu0
        %463 = vdwg.mxu0
        %v464 = vsel %vm233, %v446, 0.0
        %v465 = vsel %vm234, %v451, 0.0
        %v466 = vsel %vm235, %v456, 0.0
        %v467 = vsel %vm236, %v461, 0.0
        %v468 = vsel %vm245, %v466, 0.0
        %469 = vadd.xlane.f32.xlu0 %v468
        %v470 = vpop.xlane.xlu0 %469
        %v471 = vsel %vm245, %v467, 0.0
        %472 = vadd.xlane.f32.xlu0 %v471
        %v473 = vpop.xlane.xlu0 %472
        %v474 = vsel %vm245, %v464, 0.0
        %v475 = vsel %vm245, %v465, 0.0
        %v476 = vadd.f32 %v474, %v475
        %v477 = vadd.f32 %v476, %v468
        %v478 = vadd.f32 %v477, %v471
        %v479 = vrot.slane %v478, 4
        %v480 = vadd.f32 %v478, %v479
        %v481 = vrot.slane %v480, 2
        %v482 = vadd.f32 %v480, %v481
        %v483 = vrot.slane %v482, 1
        %v484 = vadd.f32 %v482, %v483
        %v485 = vmax.f32 %v470, 1e-24
        %v486 = vmax.f32 %v473, 1e-24
        %v487 = vrsqrt.pop %v485
        %v488 = vrsqrt.pop %v486
        %v489 = vmax.f32 %v484, 1e-24
        %v490 = vrsqrt.pop %v489
        %v491 = vmul.f32 %v487, %v490
        %v492 = vmul.f32 %v488, %v490
        %v493 = vmul.f32 %v456, %v491
        %v494 = vmul.f32 %v461, %v492
        %v495 = vstv %s225
        %v496 = vmul.f32 %v493, %v495
        %v497 = vmul.f32 %v494, %v495
        %vm498 = vcmask 130048
        %v499 = vsel %vm498, %v496, -inf
        %500 = vmax.xlane.f32.xlu0 %v499
        %v501 = vpop.xlane.xlu0 %500
        %v502 = vsel %vm498, %v497, -inf
        %503 = vmax.xlane.f32.xlu0 %v502
        %v504 = vpop.xlane.xlu0 %503
        %v505 = vsub.f32 %v496, %v501
        %v506 = vsub.f32 %v497, %v504
        %v507 = vmul.f32 %v505, 1.442695
        %v508 = vpow.pop %v507
        %v509 = vmul.f32 %v506, 1.442695
        %v510 = vpow.pop %v509
        %v511 = vsel %vm498, %v508, 0.0
        %512 = vadd.xlane.f32.xlu0 %v511
        %v513 = vpop.xlane.xlu0 %512
        %v514 = vsel %vm498, %v510, 0.0
        %515 = vadd.xlane.f32.xlu0 %v514
        %v516 = vpop.xlane.xlu0 %515
        %v517 = vrcp.pop %v513
        %v518 = vmul.f32 %v508, %v517
        %v519 = vrcp.pop %v516
        %v520 = vmul.f32 %v510, %v519
        %v522 = vsel %vm498, %v518, 0
        %v525 = vsel %vm498, %v520, 0
        %527 = vmatprep.subr.mxu0 %v376
        %528 = vmatpush1.msra.mxu0 %v375
        %529 = vmatprep.subr.mxu0 %v378
        %530 = vmatpush1.msra.mxu0 %v377
        %531 = vmatprep.subr.mxu0 0.0
        %532 = vmatpush1.msra.mxu0 0.0
        %533 = vmatprep.subr.mxu0 0.0
        %534 = vmatpush1.msra.mxu0 0.0
        %535 = vmatprep.subr.mxu0 0.0
        %536 = vmatpush1.msra.mxu0 0.0
        %537 = vmatprep.subr.mxu0 0.0
        %538 = vmatpush1.msra.mxu0 0.0
        %539 = vmatprep.subr.mxu0 0.0
        %540 = vmatpush1.msra.mxu0 0.0
        %541 = vmatprep.subr.mxu0 0.0
        %542 = vmatpush1.msra.mxu0 0.0
        %543 = vmatprep.subr.mxu0 0.0
        %544 = vmatpush1.msra.mxu0 0.0
        %545 = vmatprep.subr.mxu0 0.0
        %546 = vmatpush1.msra.mxu0 0.0
        %547 = vmatprep.subr.mxu0 0.0
        %548 = vmatpush1.msra.mxu0 0.0
        %549 = vmatprep.subr.mxu0 0.0
        %550 = vmatpush1.msra.mxu0 0.0
        %551 = vmatprep.subr.mxu0 0.0
        %552 = vmatpush1.msra.mxu0 0.0
        %553 = vmatprep.subr.mxu0 0.0
        %554 = vmatpush1.msra.mxu0 0.0
        %555 = vmatprep.subr.mxu0 0.0
        %556 = vmatpush1.msra.mxu0 0.0
        %557 = vmatprep.subr.mxu0 0.0
        %558 = vmatpush1.msra.mxu0 0.0
        %559 = vmatprep.subr.mxu0 0.0
        %560 = vmatpush1.msra.mxu0 0.0
        %561 = vmatprep.subr.mxu0 0.0
        %562 = vmatpush1.msra.mxu0 0.0
        %563 = vmatprep.subr.mxu0 0.0
        %564 = vmatpush1.msra.mxu0 0.0
        %565 = vmatprep.subr.mxu0 0.0
        %566 = vmatpush1.msra.mxu0 0.0
        %567 = vmatprep.subr.mxu0 0.0
        %568 = vmatpush1.msra.mxu0 0.0
        %569 = vmatprep.subr.mxu0 0.0
        %570 = vmatpush1.msra.mxu0 0.0
        %571 = vmatprep.subr.mxu0 0.0
        %572 = vmatpush1.msra.mxu0 0.0
        %573 = vmatprep.subr.mxu0 0.0
        %574 = vmatpush1.msra.mxu0 0.0
        %575 = vmatprep.subr.mxu0 0.0
        %576 = vmatpush1.msra.mxu0 0.0
        %577 = vmatprep.subr.mxu0 0.0
        %578 = vmatpush1.msra.mxu0 0.0
        %579 = vmatprep.subr.mxu0 0.0
        %580 = vmatpush1.msra.mxu0 0.0
        %581 = vmatprep.subr.mxu0 0.0
        %582 = vmatpush1.msra.mxu0 0.0
        %583 = vmatprep.subr.mxu0 0.0
        %584 = vmatpush1.msra.mxu0 0.0
        %585 = vmatprep.subr.mxu0 0.0
        %586 = vmatpush1.msra.mxu0 0.0
        %587 = vmatprep.subr.mxu0 0.0
        %588 = vmatpush1.msra.mxu0 0.0
        %589 = vmatprep.subr.mxu0 0.0
        %590 = vmatpush1.msra.mxu0 0.0
        %591 = vmatprep.mubr.f32.mxu0 0.0
        %592 = vmatmul.mubr.f32.gmra.mrb[0].mxu0 %v522
        %v593 = vpop.f32.mrb[0].mxu0
        %v594 = vadd.f32 0.0, %v593
        %v595 = vpop.f32.mrb[0].mxu0
        %v596 = vadd.f32 0.0, %v595
        %597 = vmatprep.mubr.f32.mxu0 0.0
        %598 = vmatmul.mubr.f32.gmra.mrb[0].mxu0 %v525
        %v599 = vpop.f32.mrb[0].mxu0
        %v600 = vadd.f32 0.0, %v599
        %v601 = vpop.f32.mrb[0].mxu0
        %v602 = vadd.f32 0.0, %v601
        %603 = vdwg.mxu0
        %604 = vst [vmem:[%s216] sm:$0xff] %v594
        %605 = vst [vmem:[%s216 + $0x8] sm:$0xff] %v596
        %606 = vst [vmem:[%s216 + $0x10] sm:$0xff] %v600
        %607 = vst [vmem:[%s216 + $0x18] sm:$0xff] %v602
        %s608 = sand.u32 %s119, 1
        %s609 = scalar_lea.sflag [#allocation5], %s608
        %s610 = sand.u32 %s119, 1
        %s611 = smul.addr %s610, 32
        %s612 = scalar_lea.vmem [#allocation6], %s611
        // Predicated region
        $region41: #{tpu_custom_call.1} parent=35 // pred_check
          %p613 = pneg %p129
        $region42: #{tpu_custom_call.1} parent=35 // pred_check_branch
          %615 = sbr.rel (%p613) target = $region44
        $region43: #{tpu_custom_call.1} parent=35 // pred_region
          %s617 = ssub.s32 512, 512
          %618 = vsyncadd %s609, %s617
          %s619 = smul.addr %s22, 4
          %s620 = smul.addr %s619, 128
          %s621 = scalar_lea.hbm %s4, %s620
          %s622 = sshll.u32 %s612, 4
          %s623 = int_to_ptr.vmem [resolvable:$true] %s622
          %628 = dma.vmem_to_hbm [thread:$0]  %s623, 512, %s621, %s609, 256, 256, 16
        $region44: #{tpu_custom_call.1} parent=35 // pred_fallthru
          _
      $region36: #{tpu_custom_call.1} parent=5 // pred_fallthru
        _
      %p629 = scmp.le.s32.totalorder 2, %s17
      // Predicated region
      $region45: #{tpu_custom_call.1} parent=5 // pred_check
        %p630 = pneg %p629
      $region46: #{tpu_custom_call.1} parent=5 // pred_check_branch
        %632 = sbr.rel (%p630) target = $region48
      $region47: #{tpu_custom_call.1} parent=5 // pred_region
        %s633 = ssub.s32 %s17, 2
        // Predicated region
        $region49: #{tpu_custom_call.1} parent=47 // pred_check
          %p634 = pneg %p135
        $region50: #{tpu_custom_call.1} parent=47 // pred_check_branch
          %636 = sbr.rel (%p634) target = $region52
        $region51: #{tpu_custom_call.1} parent=47 // pred_region
          %s637 = sand.u32 %s120, 1
          %s638 = scalar_lea.sflag [#allocation5], %s637
          %s639 = sand.u32 %s120, 1
          %s640 = smul.addr %s639, 32
          %s641 = scalar_lea.vmem [#allocation6], %s640
          %642 = dma.done %s638, 512
        $region52: #{tpu_custom_call.1} parent=47 // pred_fallthru
          _
      $region48: #{tpu_custom_call.1} parent=5 // pred_fallthru
        _
    $region6: #{tpu_custom_call.1} parent=1 // loop_footer
      %s21 = sadd.s32 1, %s17
    $region7: #{tpu_custom_call.1} parent=1 // loop_footer_branch
      %16 = sbr.rel target = $region3
    $region8: #{tpu_custom_call.1} parent=1 // loop_exit
      _
    %643 = vsyncpa [#allocation4], 1
    %s644 = scalar_lea.sflag [#allocation4], 1
    %645 = vsyncpa %s644, 1
    %646 = vsyncpa [#allocation5], 1
    %s647 = scalar_lea.sflag [#allocation5], 1
    %648 = vsyncpa %s647, 1

</llo_original>
